<compile_context>
chip_gen: v6e
topology: v6e:2x2x1
jax: 0.10.0
libtpu: 0.0.40
codegen_flags: <defaults>
</compile_context>

<pallas_src>
import math
import jax
import jax.numpy as jnp
from jax.experimental import pallas as pl
from jax.experimental.pallas import tpu as pltpu


def ptm_kernel(x_ref, ct_ref, maskT_ref, wiT_ref, bi_ref, v_ref, idx_ref, p_ref):
    # x_ref:     (TB, H)        decoder states for this batch tile
    # ct_ref:    (S, TB, H)     projected context (context_linear applied), batch on lanes
    # maskT_ref: (S, TB)        int32 mask, batch on lanes
    # wiT_ref:   (H, H)         input_linear.weight^T
    # bi_ref:    (1, H)         input_linear.bias
    # v_ref:     (1, H)         _V
    # idx_ref:   (1, TB) int32, p_ref: (1, TB) f32   lane-dense outputs
    S = ct_ref.shape[0]

    # inp = input_linear(input): one batched MXU matmul per tile        -> (TB, H)
    inp = jnp.dot(x_ref[...], wiT_ref[...],
                  preferred_element_type=jnp.float32) + bi_ref[...]

    # u = tanh(inp.unsqueeze(2) + ctx)                                  -> (S, TB, H)
    u = jnp.tanh(ct_ref[...] + inp[None, :, :])

    # att[s, b] = sum_h V[h] * u[s, b, h]                               -> (S, TB)
    att = jnp.sum(u * v_ref[...][None, :, :], axis=-1)
    att = 10.0 * jnp.tanh(att)

    # mask with -inf, softmax over the sequence axis (sublane reductions)
    valid = maskT_ref[...] != 0
    att = jnp.where(valid, att, -jnp.inf)

    amax = jnp.max(att, axis=0, keepdims=True)                          # (1, TB)
    e = jnp.exp(att - amax)                                             # (S, TB)
    denom = jnp.sum(e, axis=0, keepdims=True)                           # (1, TB)
    # p = max(softmax(att)) = max(e) / denom
    p = jnp.max(e, axis=0, keepdims=True) * pl.reciprocal(denom, approx=False)

    # indices = argmax over the sequence axis, computed from pre-softmax att
    # (softmax is monotone; first index on ties, like torch)
    iota = jax.lax.broadcasted_iota(jnp.int32, att.shape, 0)            # (S, TB)
    idx = jnp.min(jnp.where(att == amax, iota, S), axis=0, keepdims=True)

    p_ref[...] = p
    idx_ref[...] = idx.astype(jnp.int32)


def ptm_forward(x, context, mask, Wi, bi, Wc, bc, V, *, tb=128):
    """x: (B,H) f32, context: (B,S,D) f32, mask: (B,S) int 0/1.
    Wi: (H,H), bi: (H,), Wc: (H,D) (= conv1d.weight[:,:,0]), bc: (H,), V: (H,)."""
    B, H = x.shape
    _, S, D = context.shape

    # ---- hoisted projection: one large GEMM instead of B tiny (S,D)@(D,H) dots ----
    C = (context.reshape(B * S, D) @ Wc.T + bc).reshape(B, S, H)        # (B, S, H)
    CT = jnp.transpose(C, (1, 0, 2))                                    # (S, B, H)
    maskT = mask.T.astype(jnp.int32)                                    # (S, B)

    # ---- batch tiling: TB batch rows per grid step, lane-aligned ----
    if B >= tb:
        TB = tb
        Bp = ((B + TB - 1) // TB) * TB
    else:
        TB = B          # block equals full batch dim (small-batch path)
        Bp = B
    if Bp != B:
        pad = Bp - B
        x_p = jnp.pad(x, ((0, pad), (0, 0)))
        CT_p = jnp.pad(CT, ((0, 0), (0, pad), (0, 0)))
        maskT_p = jnp.pad(maskT, ((0, 0), (0, pad)))   # padded rows are all-masked; discarded
    else:
        x_p, CT_p, maskT_p = x, CT, maskT

    wiT = Wi.T                       # (H, H)
    bi2 = bi.reshape(1, H)
    v2 = V.reshape(1, H)

    grid = (Bp // TB,)

    grid_spec = pltpu.PrefetchScalarGridSpec(
        num_scalar_prefetch=0,
        grid=grid,
        in_specs=[
            pl.BlockSpec((TB, H), lambda t: (t, 0)),        # x
            pl.BlockSpec((S, TB, H), lambda t: (0, t, 0)),  # projected context (batch on lanes)
            pl.BlockSpec((S, TB), lambda t: (0, t)),        # mask (batch on lanes)
            pl.BlockSpec((H, H), lambda t: (0, 0)),         # Wi^T
            pl.BlockSpec((1, H), lambda t: (0, 0)),         # bi
            pl.BlockSpec((1, H), lambda t: (0, 0)),         # V
        ],
        out_specs=[
            pl.BlockSpec((1, TB), lambda t: (0, t)),        # indices (lane-dense)
            pl.BlockSpec((1, TB), lambda t: (0, t)),        # p       (lane-dense)
        ],
    )

    idx, p = pl.pallas_call(
        ptm_kernel,
        out_shape=(jax.ShapeDtypeStruct((1, Bp), jnp.int32),
                   jax.ShapeDtypeStruct((1, Bp), jnp.float32)),
        grid_spec=grid_spec,
        compiler_params=pltpu.CompilerParams(dimension_semantics=("parallel",)),
    )(x_p, CT_p, maskT_p, wiT, bi2, v2)

    # matches torch return: (indices (B,), p.unsqueeze(1) (B,1), mask.bool() (B,S))
    return idx[0, :B], p[0, :B].reshape(B, 1), mask.astype(bool)


def ptm_ref(x, context, mask, Wi, bi, Wc, bc, V):
    """Pure-JAX reference matching the PyTorch forward."""
    inp = x @ Wi.T + bi                                             # (B, H)
    ctx = jnp.einsum('bsd,hd->bhs', context, Wc) + bc[None, :, None]
    u = jnp.tanh(inp[:, :, None] + ctx)                             # (B, H, S)
    att = jnp.einsum('h,bhs->bs', V, u)
    att = 10.0 * jnp.tanh(att)
    att = jnp.where(mask.astype(bool), att, -jnp.inf)
    ans = jax.nn.softmax(att, axis=1)
    p = jnp.max(ans, axis=1)
    ind = jnp.argmax(ans, axis=1)
    return ind, p[:, None], mask.astype(bool)


if __name__ == "__main__":
    B, S, D, H = 2, 8, 4, 32   # batch, seq_len, input_dim, hidden_dim

    key = jax.random.PRNGKey(0)
    ks = jax.random.split(key, 8)

    # deterministic parameter init (shapes match the torch module)
    bound_lin = 1.0 / math.sqrt(H)
    Wi = jax.random.uniform(ks[0], (H, H), jnp.float32, -bound_lin, bound_lin)   # input_linear.weight
    bi = jax.random.uniform(ks[1], (H,), jnp.float32, -bound_lin, bound_lin)     # input_linear.bias
    bound_conv = 1.0 / math.sqrt(D)
    Wc = jax.random.uniform(ks[2], (H, D), jnp.float32, -bound_conv, bound_conv) # conv1d.weight[:,:,0]
    bc = jax.random.uniform(ks[3], (H,), jnp.float32, -bound_conv, bound_conv)   # conv1d.bias
    V = jax.random.uniform(ks[4], (H,), jnp.float32, -bound_lin, bound_lin)      # _V

    # inputs
    x = jax.random.normal(ks[5], (B, H), jnp.float32)
    context = jax.random.normal(ks[6], (B, S, D), jnp.float32)
    mask = (jax.random.uniform(ks[7], (B, S)) > 0.3).astype(jnp.int32)
    mask = mask.at[:, 0].set(1)   # guarantee at least one valid position per row

    ind, p, mbool = ptm_forward(x, context, mask, Wi, bi, Wc, bc, V)
    jax.block_until_ready((ind, p, mbool))

    ind_r, p_r, mbool_r = ptm_ref(x, context, mask, Wi, bi, Wc, bc, V)
    assert jnp.array_equal(ind.astype(jnp.int32), ind_r.astype(jnp.int32)), (ind, ind_r)
    assert jnp.allclose(p, p_r, atol=1e-5, rtol=1e-5), (p, p_r)
    assert jnp.array_equal(mbool, mbool_r)

    print("KERNEL_OK")
</pallas_src>

<mosaic_0001>
module attributes {stable_mosaic.version = 11 : i64} {
  func.func @ptm_kernel(%arg0: i32, %arg1: memref<2x32xf32, #tpu.memory_space<vmem>>, %arg2: memref<8x2x32xf32, #tpu.memory_space<vmem>>, %arg3: memref<8x2xi32, #tpu.memory_space<vmem>>, %arg4: memref<32x32xf32, #tpu.memory_space<vmem>>, %arg5: memref<1x32xf32, #tpu.memory_space<vmem>>, %arg6: memref<1x32xf32, #tpu.memory_space<vmem>>, %arg7: memref<1x2xi32, #tpu.memory_space<vmem>>, %arg8: memref<1x2xf32, #tpu.memory_space<vmem>>) attributes {dimension_semantics = [#tpu.dimension_semantics<parallel>], iteration_bounds = array<i64: 1>, scalar_prefetch = 0 : i64, scratch_operands = 0 : i64, tpu.core_type = #tpu.core_type<tc>, window_params = [{transform_indices = @transform_0, window_bounds = array<i64: 2, 32>}, {transform_indices = @transform_1, window_bounds = array<i64: 8, 2, 32>}, {transform_indices = @transform_2, window_bounds = array<i64: 8, 2>}, {pipeline_mode = #tpu.pipeline_mode<synchronous>, transform_indices = @transform_3, window_bounds = array<i64: 32, 32>}, {pipeline_mode = #tpu.pipeline_mode<synchronous>, transform_indices = @transform_4, window_bounds = array<i64: 1, 32>}, {pipeline_mode = #tpu.pipeline_mode<synchronous>, transform_indices = @transform_5, window_bounds = array<i64: 1, 32>}, {transform_indices = @transform_6, window_bounds = array<i64: 1, 2>}, {transform_indices = @transform_7, window_bounds = array<i64: 1, 2>}]} {
    %c0 = arith.constant 0 : index
    %c0_0 = arith.constant 0 : index
    %0 = vector.load %arg1[%c0, %c0_0] : memref<2x32xf32, #tpu.memory_space<vmem>>, vector<2x32xf32>
    %c0_1 = arith.constant 0 : index
    %c0_2 = arith.constant 0 : index
    %1 = vector.load %arg4[%c0_1, %c0_2] : memref<32x32xf32, #tpu.memory_space<vmem>>, vector<32x32xf32>
    %cst = arith.constant dense<0.000000e+00> : vector<2x32xf32>
    %2 = tpu.matmul %0, %1, %cst {dimension_numbers = #tpu.dot_dimension_numbers<[1], [0], [0], [1], [0, 0, 1, 1], [], []>} : vector<2x32xf32>, vector<32x32xf32>, vector<2x32xf32> -> vector<2x32xf32>
    %c0_3 = arith.constant 0 : index
    %c0_4 = arith.constant 0 : index
    %3 = vector.load %arg5[%c0_3, %c0_4] : memref<1x32xf32, #tpu.memory_space<vmem>>, vector<1x32xf32>
    %4 = vector.broadcast %3 : vector<1x32xf32> to vector<2x32xf32>
    %5 = arith.addf %2, %4 : vector<2x32xf32>
    %c0_5 = arith.constant 0 : index
    %c0_6 = arith.constant 0 : index
    %c0_7 = arith.constant 0 : index
    %6 = vector.load %arg2[%c0_5, %c0_6, %c0_7] : memref<8x2x32xf32, #tpu.memory_space<vmem>>, vector<8x2x32xf32>
    %7 = vector.shape_cast %5 : vector<2x32xf32> to vector<1x2x32xf32>
    %8 = vector.broadcast %7 : vector<1x2x32xf32> to vector<8x2x32xf32>
    %9 = arith.addf %6, %8 : vector<8x2x32xf32>
    %10 = math.tanh %9 : vector<8x2x32xf32>
    %c0_8 = arith.constant 0 : index
    %c0_9 = arith.constant 0 : index
    %11 = vector.load %arg6[%c0_8, %c0_9] : memref<1x32xf32, #tpu.memory_space<vmem>>, vector<1x32xf32>
    %12 = vector.shape_cast %11 : vector<1x32xf32> to vector<1x1x32xf32>
    %13 = vector.broadcast %12 : vector<1x1x32xf32> to vector<8x2x32xf32>
    %14 = arith.mulf %10, %13 : vector<8x2x32xf32>
    %cst_10 = arith.constant dense<0.000000e+00> : vector<8x2xf32>
    %15 = vector.multi_reduction <add>, %14, %cst_10 [2] : vector<8x2x32xf32> to vector<8x2xf32>
    %16 = math.tanh %15 : vector<8x2xf32>
    %cst_11 = arith.constant 1.000000e+01 : f32
    %17 = vector.broadcast %cst_11 : f32 to vector<8x2xf32>
    %18 = arith.mulf %17, %16 : vector<8x2xf32>
    %c0_12 = arith.constant 0 : index
    %c0_13 = arith.constant 0 : index
    %19 = vector.load %arg3[%c0_12, %c0_13] : memref<8x2xi32, #tpu.memory_space<vmem>>, vector<8x2xi32>
    %c0_i32 = arith.constant 0 : i32
    %20 = vector.broadcast %c0_i32 : i32 to vector<8x2xi32>
    %21 = arith.cmpi ne, %19, %20 : vector<8x2xi32>
    %cst_14 = arith.constant 0xFF800000 : f32
    %22 = vector.broadcast %cst_14 : f32 to vector<8x2xf32>
    %23 = arith.select %21, %18, %22 : vector<8x2xi1>, vector<8x2xf32>
    %cst_15 = arith.constant dense<0xFF800000> : vector<2xf32>
    %24 = vector.multi_reduction <maximumf>, %23, %cst_15 [0] : vector<8x2xf32> to vector<2xf32>
    %25 = vector.shape_cast %24 : vector<2xf32> to vector<1x2xf32>
    %26 = vector.broadcast %25 : vector<1x2xf32> to vector<8x2xf32>
    %27 = arith.subf %23, %26 : vector<8x2xf32>
    %28 = math.exp %27 : vector<8x2xf32>
    %cst_16 = arith.constant dense<0.000000e+00> : vector<2xf32>
    %29 = vector.multi_reduction <add>, %28, %cst_16 [0] : vector<8x2xf32> to vector<2xf32>
    %30 = vector.shape_cast %29 : vector<2xf32> to vector<1x2xf32>
    %cst_17 = arith.constant dense<0xFF800000> : vector<2xf32>
    %31 = vector.multi_reduction <maximumf>, %28, %cst_17 [0] : vector<8x2xf32> to vector<2xf32>
    %32 = vector.shape_cast %31 : vector<2xf32> to vector<1x2xf32>
    %33 = tpu.reciprocal %30 : vector<1x2xf32> -> vector<1x2xf32>
    %34 = arith.mulf %32, %33 : vector<1x2xf32>
    %35 = tpu.iota {dimensions = array<i32: 0>} : vector<8x2xi32>
    %36 = vector.broadcast %25 : vector<1x2xf32> to vector<8x2xf32>
    %37 = arith.cmpf oeq, %23, %36 : vector<8x2xf32>
    %c8_i32 = arith.constant 8 : i32
    %38 = vector.broadcast %c8_i32 : i32 to vector<8x2xi32>
    %39 = arith.select %37, %35, %38 : vector<8x2xi1>, vector<8x2xi32>
    %cst_18 = arith.constant dense<2147483647> : vector<2xi32>
    %40 = vector.multi_reduction <minsi>, %39, %cst_18 [0] : vector<8x2xi32> to vector<2xi32>
    %41 = vector.shape_cast %40 : vector<2xi32> to vector<1x2xi32>
    %c0_19 = arith.constant 0 : index
    %c0_20 = arith.constant 0 : index
    %42 = vector.load %arg8[%c0_19, %c0_20] : memref<1x2xf32, #tpu.memory_space<vmem>>, vector<1x2xf32>
    tpu.vector_store %arg8[%c0_19, %c0_20], %34 {strides = array<i32>} : memref<1x2xf32, #tpu.memory_space<vmem>>, vector<1x2xf32>,
    %c0_21 = arith.constant 0 : index
    %c0_22 = arith.constant 0 : index
    %43 = vector.load %arg7[%c0_21, %c0_22] : memref<1x2xi32, #tpu.memory_space<vmem>>, vector<1x2xi32>
    tpu.vector_store %arg7[%c0_21, %c0_22], %41 {strides = array<i32>} : memref<1x2xi32, #tpu.memory_space<vmem>>, vector<1x2xi32>,
    return
  }
  func.func @transform_0(%arg0: i32) -> (i32, i32) {
    %c0_i32 = arith.constant 0 : i32
    %c0_i32_0 = arith.constant 0 : i32
    return %arg0, %c0_i32 : i32, i32
  }
  func.func @transform_1(%arg0: i32) -> (i32, i32, i32) {
    %c0_i32 = arith.constant 0 : i32
    %c0_i32_0 = arith.constant 0 : i32
    %c0_i32_1 = arith.constant 0 : i32
    return %c0_i32, %arg0, %c0_i32_0 : i32, i32, i32
  }
  func.func @transform_2(%arg0: i32) -> (i32, i32) {
    %c0_i32 = arith.constant 0 : i32
    %c0_i32_0 = arith.constant 0 : i32
    return %c0_i32, %arg0 : i32, i32
  }
  func.func @transform_3(%arg0: i32) -> (i32, i32) {
    %c0_i32 = arith.constant 0 : i32
    %c0_i32_0 = arith.constant 0 : i32
    %c0_i32_1 = arith.constant 0 : i32
    return %c0_i32, %c0_i32_0 : i32, i32
  }
  func.func @transform_4(%arg0: i32) -> (i32, i32) {
    %c0_i32 = arith.constant 0 : i32
    %c0_i32_0 = arith.constant 0 : i32
    %c0_i32_1 = arith.constant 0 : i32
    return %c0_i32, %c0_i32_0 : i32, i32
  }
  func.func @transform_5(%arg0: i32) -> (i32, i32) {
    %c0_i32 = arith.constant 0 : i32
    %c0_i32_0 = arith.constant 0 : i32
    %c0_i32_1 = arith.constant 0 : i32
    return %c0_i32, %c0_i32_0 : i32, i32
  }
  func.func @transform_6(%arg0: i32) -> (i32, i32) {
    %c0_i32 = arith.constant 0 : i32
    %c0_i32_0 = arith.constant 0 : i32
    return %c0_i32, %arg0 : i32, i32
  }
  func.func @transform_7(%arg0: i32) -> (i32, i32) {
    %c0_i32 = arith.constant 0 : i32
    %c0_i32_0 = arith.constant 0 : i32
    return %c0_i32, %arg0 : i32, i32
  }
}

</mosaic_0001>

<llo_original>
// kernel: tpu_custom_call.1
$region0: #{tpu_custom_call.1}
  #allocation0 [shape = 'u32[]', space=smem, size = 0x4, offset = 0x4, fixed_abs, tag = 'smem constant byte address 0x4 - core index']
  #allocation1 [shape = 'u32[144,128]{1,0:T(1,128)}', space=vmem, size = 0x12000, scoped, tag = 'internal scratch']
  %s0 = inlined_call_operand.vmem [shape: f32[2,32], index: 0, kind: input, shape index: {}]
  %s1 = inlined_call_operand.hbm [shape: f32[8,2,32], index: 1, kind: input, shape index: {}]
  %s2 = inlined_call_operand.vmem [shape: s32[8,2], index: 2, kind: input, shape index: {}]
  %s3 = inlined_call_operand.hbm [shape: f32[32,32], index: 3, kind: input, shape index: {}]
  %s4 = inlined_call_operand.vmem [shape: f32[1,32], index: 4, kind: input, shape index: {}]
  %s5 = inlined_call_operand.vmem [shape: f32[1,32], index: 5, kind: input, shape index: {}]
  %s6 = inlined_call_operand.hbm [shape: s32[1,2], index: 6, kind: output, shape index: {0}]
  %s7 = inlined_call_operand.hbm [shape: f32[1,2], index: 7, kind: output, shape index: {1}]
  %8 = xla_tuple %s6, %s7
  %s9 = sld [smem:[#allocation0]]
  $region50: #{tpu_custom_call.1} parent=0
    _
  %s11 = ssub.s32 1, %s9
  %s12 = scalar_select 0, %s11, %s9
  $region1: #{tpu_custom_call.1} parent=0
    #allocation2 [shape = 'u8[8192]{0}', space=vmem, size = 0x2000, scoped, tag = 'input window, operand 1, single buffered']
    #allocation3 [shape = 's32[1]{0}', space=sflag, size = 0x4, scoped, tag = 'scoped memory for tpu_custom_call.1']
    #allocation4 [shape = 's32[1]{0}', space=sflag, size = 0x4, scoped, tag = 'scoped memory for tpu_custom_call.1']
    #allocation5 [shape = 'u8[16384]{0}', space=vmem, size = 0x4000, scoped, tag = 'input window, operand 3, single buffered']
    #allocation6 [shape = 's32[1]{0}', space=sflag, size = 0x4, scoped, tag = 'scoped memory for tpu_custom_call.1']
    #allocation7 [shape = 'u8[512]{0}', space=vmem, size = 0x400, scoped, tag = 'output window, operand 0, single buffered']
    #allocation8 [shape = 'u8[512]{0}', space=vmem, size = 0x400, scoped, tag = 'output window, operand 1, single buffered']
    #allocation9 [shape = 's32[1]{0}', space=sflag, size = 0x4, scoped, tag = 'scoped memory for tpu_custom_call.1']
    %13 = vsyncpa [#allocation3], 0
    %14 = vsyncpa [#allocation6], 0
    %15 = vsyncpa [#allocation4], 0
    %16 = vsyncpa [#allocation9], 0
    // Predicated region
    $region2: #{tpu_custom_call.1} parent=1 // pred_check
      _
    $region3: #{tpu_custom_call.1} parent=1 // pred_check_branch
      %18 = sbr.rel (0) target = $region5
    $region4: #{tpu_custom_call.1} parent=1 // pred_region
      _
    $region5: #{tpu_custom_call.1} parent=1 // pred_fallthru
      _
    // Predicated region
    $region6: #{tpu_custom_call.1} parent=1 // pred_check
      _
    $region7: #{tpu_custom_call.1} parent=1 // pred_check_branch
      %20 = sbr.rel (0) target = $region9
    $region8: #{tpu_custom_call.1} parent=1 // pred_region
      %s22 = ssub.s32 256, 256
      %23 = vsyncadd [#allocation3], %s22
      %s24 = sshll.u32 [#allocation2], 4
      %s25 = int_to_ptr.vmem [resolvable:$true] %s24
      %30 = dma.hbm_to_vmem [thread:$0]  %s1, 256, %s25, [#allocation3], 32, 32, 2
    $region9: #{tpu_custom_call.1} parent=1 // pred_fallthru
      _
    // Predicated region
    $region10: #{tpu_custom_call.1} parent=1 // pred_check
      _
    $region11: #{tpu_custom_call.1} parent=1 // pred_check_branch
      %32 = sbr.rel (0) target = $region13
    $region12: #{tpu_custom_call.1} parent=1 // pred_region
      _
    $region13: #{tpu_custom_call.1} parent=1 // pred_fallthru
      _
    // Predicated region
    $region14: #{tpu_custom_call.1} parent=1 // pred_check
      _
    $region15: #{tpu_custom_call.1} parent=1 // pred_check_branch
      %34 = sbr.rel (0) target = $region17
    $region16: #{tpu_custom_call.1} parent=1 // pred_region
      %s36 = ssub.s32 512, 512
      %37 = vsyncadd [#allocation6], %s36
      %s38 = sshll.u32 [#allocation5], 4
      %s39 = int_to_ptr.vmem [resolvable:$true] %s38
      %44 = dma.hbm_to_vmem [thread:$0]  %s3, 512, %s39, [#allocation6], 128, 128, 8
    $region17: #{tpu_custom_call.1} parent=1 // pred_fallthru
      _
    // Predicated region
    $region18: #{tpu_custom_call.1} parent=1 // pred_check
      _
    $region19: #{tpu_custom_call.1} parent=1 // pred_check_branch
      %46 = sbr.rel (0) target = $region21
    $region20: #{tpu_custom_call.1} parent=1 // pred_region
      _
    $region21: #{tpu_custom_call.1} parent=1 // pred_fallthru
      _
    // Predicated region
    $region22: #{tpu_custom_call.1} parent=1 // pred_check
      _
    $region23: #{tpu_custom_call.1} parent=1 // pred_check_branch
      %48 = sbr.rel (0) target = $region25
    $region24: #{tpu_custom_call.1} parent=1 // pred_region
      _
    $region25: #{tpu_custom_call.1} parent=1 // pred_fallthru
      _
    // Predicated region
    $region26: #{tpu_custom_call.1} parent=1 // pred_check
      _
    $region27: #{tpu_custom_call.1} parent=1 // pred_check_branch
      %50 = sbr.rel (0) target = $region29
    $region28: #{tpu_custom_call.1} parent=1 // pred_region
      %51 = dma.done [#allocation3], 256
    $region29: #{tpu_custom_call.1} parent=1 // pred_fallthru
      _
    // Predicated region
    $region30: #{tpu_custom_call.1} parent=1 // pred_check
      _
    $region31: #{tpu_custom_call.1} parent=1 // pred_check_branch
      %53 = sbr.rel (0) target = $region33
    $region32: #{tpu_custom_call.1} parent=1 // pred_region
      %54 = dma.done [#allocation6], 512
    $region33: #{tpu_custom_call.1} parent=1 // pred_fallthru
      _
    %v55 = vld [vmem:[%s0] sm:$0x3]
    %v56 = vld [vmem:[#allocation5] sm:$0xff]
    %v57 = vld [vmem:[#allocation5 + $0x8] sm:$0xff]
    %v58 = vld [vmem:[#allocation5 + $0x10] sm:$0xff]
    %v59 = vld [vmem:[#allocation5 + $0x18] sm:$0xff]
    %v60 = vld [vmem:[%s4] sm:$0x1]
    %v62 = vlaneseq
    %v63 = vshrl.u32 %v62, 7
    %v64 = vsub.s32 0, %v63
    %v65 = vrot.slane %v60, %v64
    %vm67 = vcmask 261120
    %v69 = vsel %vm67, %v55, 0
    %71 = vmatprep.subr.mxu0 0.0
    %72 = vmatpush1.msra.mxu0 0.0
    %73 = vmatprep.subr.mxu0 0.0
    %74 = vmatpush1.msra.mxu0 0.0
    %75 = vmatprep.subr.mxu0 0.0
    %76 = vmatpush1.msra.mxu0 0.0
    %77 = vmatprep.subr.mxu0 0.0
    %78 = vmatpush1.msra.mxu0 0.0
    %79 = vmatprep.subr.mxu0 0.0
    %80 = vmatpush1.msra.mxu0 0.0
    %81 = vmatprep.subr.mxu0 0.0
    %82 = vmatpush1.msra.mxu0 0.0
    %83 = vmatprep.subr.mxu0 0.0
    %84 = vmatpush1.msra.mxu0 0.0
    %85 = vmatprep.subr.mxu0 0.0
    %86 = vmatpush1.msra.mxu0 0.0
    %87 = vmatprep.subr.mxu0 0.0
    %88 = vmatpush1.msra.mxu0 0.0
    %89 = vmatprep.subr.mxu0 0.0
    %90 = vmatpush1.msra.mxu0 0.0
    %91 = vmatprep.subr.mxu0 0.0
    %92 = vmatpush1.msra.mxu0 0.0
    %93 = vmatprep.subr.mxu0 0.0
    %94 = vmatpush1.msra.mxu0 0.0
    %95 = vmatprep.subr.mxu0 0.0
    %96 = vmatpush1.msra.mxu0 %v59
    %97 = vmatprep.subr.mxu0 0.0
    %98 = vmatpush1.msra.mxu0 %v58
    %99 = vmatprep.subr.mxu0 0.0
    %100 = vmatpush1.msra.mxu0 %v57
    %101 = vmatprep.subr.mxu0 0.0
    %102 = vmatpush1.msra.mxu0 %v56
    %103 = vmatprep.subr.mxu0 0.0
    %104 = vmatpush2.msra.mxu0 0.0
    %105 = vmatprep.subr.mxu0 0.0
    %106 = vmatpush2.msra.mxu0 0.0
    %107 = vmatprep.subr.mxu0 0.0
    %108 = vmatpush2.msra.mxu0 0.0
    %109 = vmatprep.subr.mxu0 0.0
    %110 = vmatpush2.msra.mxu0 0.0
    %111 = vmatprep.subr.mxu0 0.0
    %112 = vmatpush2.msra.mxu0 0.0
    %113 = vmatprep.subr.mxu0 0.0
    %114 = vmatpush2.msra.mxu0 0.0
    %115 = vmatprep.subr.mxu0 0.0
    %116 = vmatpush2.msra.mxu0 0.0
    %117 = vmatprep.subr.mxu0 0.0
    %118 = vmatpush2.msra.mxu0 0.0
    %119 = vmatprep.subr.mxu0 0.0
    %120 = vmatpush2.msra.mxu0 0.0
    %121 = vmatprep.subr.mxu0 0.0
    %122 = vmatpush2.msra.mxu0 0.0
    %123 = vmatprep.subr.mxu0 0.0
    %124 = vmatpush2.msra.mxu0 0.0
    %125 = vmatprep.subr.mxu0 0.0
    %126 = vmatpush2.msra.mxu0 0.0
    %127 = vmatprep.subr.mxu0 0.0
    %128 = vmatpush2.msra.mxu0 0.0
    %129 = vmatprep.subr.mxu0 0.0
    %130 = vmatpush2.msra.mxu0 0.0
    %131 = vmatprep.subr.mxu0 0.0
    %132 = vmatpush2.msra.mxu0 0.0
    %133 = vmatprep.subr.mxu0 0.0
    %134 = vmatpush2.msra.mxu0 0.0
    %135 = vmatprep.mubr.f32.mxu0 0.0
    %136 = vmatmul.mubr.f32.gmra.mxu0 %v69
    %v137 = vpop.f32.mrf.mxu0
    %v138 = vadd.f32 %v65, %v137
    %v139 = vpop.f32.mrf.mxu0
    %140 = vdwg.mxu0
    %v141 = vld [vmem:[#allocation2] sm:$0x3]
    %v142 = vld [vmem:[#allocation2 + $0x2] sm:$0x3]
    %v143 = vld [vmem:[#allocation2 + $0x4] sm:$0x3]
    %v144 = vld [vmem:[#allocation2 + $0x6] sm:$0x3]
    %v145 = vld [vmem:[#allocation2 + $0x8] sm:$0x3]
    %v146 = vld [vmem:[#allocation2 + $0xa] sm:$0x3]
    %v147 = vld [vmem:[#allocation2 + $0xc] sm:$0x3]
    %v148 = vld [vmem:[#allocation2 + $0xe] sm:$0x3]
    %v149 = vadd.f32 %v141, %v138
    %v150 = vadd.f32 %v142, %v138
    %v151 = vadd.f32 %v143, %v138
    %v152 = vadd.f32 %v144, %v138
    %v153 = vadd.f32 %v145, %v138
    %v154 = vadd.f32 %v146, %v138
    %v155 = vadd.f32 %v147, %v138
    %v156 = vadd.f32 %v148, %v138
    %v157 = vtanh.pop %v149
    %v158 = vtanh.pop %v150
    %v159 = vtanh.pop %v151
    %v160 = vtanh.pop %v152
    %v161 = vtanh.pop %v153
    %v162 = vtanh.pop %v154
    %v163 = vtanh.pop %v155
    %v164 = vtanh.pop %v156
    %v165 = vld [vmem:[%s5] sm:$0x1]
    %v167 = vlaneseq
    %v168 = vshrl.u32 %v167, 7
    %v169 = vsub.s32 0, %v168
    %v170 = vrot.slane %v165, %v169
    %v172 = vmul.f32 %v157, %v170
    %v173 = vmul.f32 %v158, %v170
    %v174 = vmul.f32 %v159, %v170
    %v175 = vmul.f32 %v160, %v170
    %v176 = vmul.f32 %v161, %v170
    %v177 = vmul.f32 %v162, %v170
    %v178 = vmul.f32 %v163, %v170
    %v179 = vmul.f32 %v164, %v170
    %vm180 = vcmask 254976
    %v181 = vsel %vm180, %v172, 0.0
    %182 = vadd.xlane.f32.xlu0 %v181
    %v183 = vpop.xlane.xlu0 %182
    %v184 = vsel %vm180, %v173, 0.0
    %185 = vadd.xlane.f32.xlu0 %v184
    %v186 = vpop.xlane.xlu0 %185
    %v187 = vsel %vm180, %v174, 0.0
    %188 = vadd.xlane.f32.xlu0 %v187
    %v189 = vpop.xlane.xlu0 %188
    %v190 = vsel %vm180, %v175, 0.0
    %191 = vadd.xlane.f32.xlu0 %v190
    %v192 = vpop.xlane.xlu0 %191
    %v193 = vsel %vm180, %v176, 0.0
    %194 = vadd.xlane.f32.xlu0 %v193
    %v195 = vpop.xlane.xlu0 %194
    %v196 = vsel %vm180, %v177, 0.0
    %197 = vadd.xlane.f32.xlu0 %v196
    %v198 = vpop.xlane.xlu0 %197
    %v199 = vsel %vm180, %v178, 0.0
    %200 = vadd.xlane.f32.xlu0 %v199
    %v201 = vpop.xlane.xlu0 %200
    %v202 = vsel %vm180, %v179, 0.0
    %203 = vadd.xlane.f32.xlu0 %v202
    %v204 = vpop.xlane.xlu0 %203
    %v205 = vtanh.pop %v183
    %v206 = vtanh.pop %v186
    %v207 = vtanh.pop %v189
    %v208 = vtanh.pop %v192
    %v209 = vtanh.pop %v195
    %v210 = vtanh.pop %v198
    %v211 = vtanh.pop %v201
    %v212 = vtanh.pop %v204
    %v213 = vmul.f32 %v205, 10.0
    %v214 = vmul.f32 %v206, 10.0
    %v215 = vmul.f32 %v207, 10.0
    %v216 = vmul.f32 %v208, 10.0
    %v217 = vmul.f32 %v209, 10.0
    %v218 = vmul.f32 %v210, 10.0
    %v219 = vmul.f32 %v211, 10.0
    %v220 = vmul.f32 %v212, 10.0
    %v221 = vld [vmem:[%s2] sm:$0xff]
    %vm222 = vcmp.ne.s32.totalorder %v221, 0
    %v231 = vlaneseq
    %v232 = vand.u32 %v231, 127
    %v233 = vlaneseq
    %v234 = vshrl.u32 %v233, 7
    %v235 = vsub.s32 %v232, %v234
    %v236 = vrot.slane %v213, %v235
    %v237 = vlaneseq
    %v238 = vshrl.u32 %v237, 7
    %v239 = vsub.s32 %v232, %v238
    %v240 = vrot.slane %v214, %v239
    %v241 = vlaneseq
    %v242 = vshrl.u32 %v241, 7
    %v243 = vsub.s32 %v232, %v242
    %v244 = vrot.slane %v215, %v243
    %v245 = vlaneseq
    %v246 = vshrl.u32 %v245, 7
    %v247 = vsub.s32 %v232, %v246
    %v248 = vrot.slane %v216, %v247
    %v249 = vlaneseq
    %v250 = vshrl.u32 %v249, 7
    %v251 = vsub.s32 %v232, %v250
    %v252 = vrot.slane %v217, %v251
    %v253 = vlaneseq
    %v254 = vshrl.u32 %v253, 7
    %v255 = vsub.s32 %v232, %v254
    %v256 = vrot.slane %v218, %v255
    %v257 = vlaneseq
    %v258 = vshrl.u32 %v257, 7
    %v259 = vsub.s32 %v232, %v258
    %v260 = vrot.slane %v219, %v259
    %v261 = vlaneseq
    %v262 = vshrl.u32 %v261, 7
    %v263 = vsub.s32 %v232, %v262
    %v264 = vrot.slane %v220, %v263
    %vm265 = vcmask 1041409
    %v266 = vsel %vm265, %v240, %v236
    %vm267 = vcmask 1042434
    %v268 = vsel %vm267, %v244, %v266
    %vm269 = vcmask 1043459
    %v270 = vsel %vm269, %v248, %v268
    %vm271 = vcmask 1044484
    %v272 = vsel %vm271, %v252, %v270
    %vm273 = vcmask 1045509
    %v274 = vsel %vm273, %v256, %v272
    %vm275 = vcmask 1046534
    %v276 = vsel %vm275, %v260, %v274
    %vm277 = vcmask 1047559
    %v278 = vsel %vm277, %v264, %v276
    %v280 = vsel %vm222, %v278, -inf
    %vm281 = vcmask 15360
    %v282 = vsel %vm281, %v280, -inf
    %v283 = vrot.slane %v282, 4
    %v284 = vmax.f32 %v282, %v283
    %v285 = vrot.slane %v284, 2
    %v286 = vmax.f32 %v284, %v285
    %v287 = vrot.slane %v286, 1
    %v288 = vmax.f32 %v286, %v287
    %v289 = vsub.f32 %v280, %v288
    %v290 = vmul.f32 %v289, 1.442695
    %v291 = vpow.pop %v290
    %v292 = vsel %vm281, %v291, 0.0
    %v293 = vrot.slane %v292, 4
    %v294 = vadd.f32 %v292, %v293
    %v295 = vrot.slane %v294, 2
    %v296 = vadd.f32 %v294, %v295
    %v297 = vrot.slane %v296, 1
    %v298 = vadd.f32 %v296, %v297
    %v299 = vsel %vm281, %v291, -inf
    %v300 = vrot.slane %v299, 4
    %v301 = vmax.f32 %v299, %v300
    %v302 = vrot.slane %v301, 2
    %v303 = vmax.f32 %v301, %v302
    %v304 = vrot.slane %v303, 1
    %v305 = vmax.f32 %v303, %v304
    %v306 = vrcp.pop %v298
    %v307 = vmul.f32 %v305, %v306
    %v308 = vlaneseq
    %v309 = vshrl.u32 %v308, 7
    %vm310 = vcmp.eq.f32.partialorder %v280, %v288
    %v311 = vsel %vm310, %v309, 8
    %v312 = vsel %vm281, %v311, 2147483647
    %v313 = vrot.slane %v312, 4
    %vm314 = vcmp.lt.s32.totalorder %v312, %v313
    %v315 = vsel %vm314, %v312, %v313
    %v316 = vrot.slane %v315, 2
    %vm317 = vcmp.lt.s32.totalorder %v315, %v316
    %v318 = vsel %vm317, %v315, %v316
    %v319 = vrot.slane %v318, 1
    %vm320 = vcmp.lt.s32.totalorder %v318, %v319
    %v321 = vsel %vm320, %v318, %v319
    %vm322 = vcmask 8192
    %323 = vst.msk [vmem:[#allocation8] sm:$0x1] %vm322, %v307
    %324 = vst.msk [vmem:[#allocation7] sm:$0x1] %vm322, %v321
    // Predicated region
    $region34: #{tpu_custom_call.1} parent=1 // pred_check
      _
    $region35: #{tpu_custom_call.1} parent=1 // pred_check_branch
      %326 = sbr.rel (0) target = $region37
    $region36: #{tpu_custom_call.1} parent=1 // pred_region
      %s328 = ssub.s32 16, 16
      %329 = vsyncadd [#allocation4], %s328
      %s331 = sshll.u32 [#allocation7], 4
      %s332 = int_to_ptr.vmem [resolvable:$true] %s331
      %334 = dma.vmem_to_hbm [thread:$0]  %s332, 16, %s6, [#allocation4]
    $region37: #{tpu_custom_call.1} parent=1 // pred_fallthru
      _
    // Predicated region
    $region38: #{tpu_custom_call.1} parent=1 // pred_check
      _
    $region39: #{tpu_custom_call.1} parent=1 // pred_check_branch
      %336 = sbr.rel (0) target = $region41
    $region40: #{tpu_custom_call.1} parent=1 // pred_region
      %s338 = ssub.s32 16, 16
      %339 = vsyncadd [#allocation9], %s338
      %s341 = sshll.u32 [#allocation8], 4
      %s342 = int_to_ptr.vmem [resolvable:$true] %s341
      %344 = dma.vmem_to_hbm [thread:$0]  %s342, 16, %s7, [#allocation9]
    $region41: #{tpu_custom_call.1} parent=1 // pred_fallthru
      _
    // Predicated region
    $region42: #{tpu_custom_call.1} parent=1 // pred_check
      _
    $region43: #{tpu_custom_call.1} parent=1 // pred_check_branch
      %346 = sbr.rel (0) target = $region45
    $region44: #{tpu_custom_call.1} parent=1 // pred_region
      %347 = dma.done [#allocation4], 16
    $region45: #{tpu_custom_call.1} parent=1 // pred_fallthru
      _
    // Predicated region
    $region46: #{tpu_custom_call.1} parent=1 // pred_check
      _
    $region47: #{tpu_custom_call.1} parent=1 // pred_check_branch
      %349 = sbr.rel (0) target = $region49
    $region48: #{tpu_custom_call.1} parent=1 // pred_region
      %350 = dma.done [#allocation9], 16
    $region49: #{tpu_custom_call.1} parent=1 // pred_fallthru
      _
    %351 = vsyncpa [#allocation3], 1
    %352 = vsyncpa [#allocation6], 1
    %353 = vsyncpa [#allocation4], 1
    %354 = vsyncpa [#allocation9], 1

</llo_original>
